<compile_context>
chip_gen: v5e
topology: v5e:2x2
jax: 0.10.0
libtpu: 0.0.40
codegen_flags: <defaults>
</compile_context>

<pallas_src>
import functools
import math

import jax
import jax.numpy as jnp
from jax.experimental import pallas as pl
from jax.experimental.pallas import tpu as pltpu

_HALF_LOG_2PI = 0.5 * math.log(2.0 * math.pi)


def _gaussian_policy_kernel(*refs, num_layers: int, has_action: bool):
    # Ref layout:
    #   inputs : x, (w1, b1), ..., (wL, bL), log_std, noise, [a]
    #   outputs: pi, logp_pi, [logp]
    idx = 0
    x_ref = refs[idx]; idx += 1
    layer_refs = []
    for _ in range(num_layers):
        layer_refs.append((refs[idx], refs[idx + 1]))
        idx += 2
    log_std_ref = refs[idx]; noise_ref = refs[idx + 1]; idx += 2
    if has_action:
        a_ref = refs[idx]; idx += 1
    pi_ref = refs[idx]; logp_pi_ref = refs[idx + 1]
    if has_action:
        logp_ref = refs[idx + 2]

    # --- fused MLP: hidden layers tanh(x @ Wt + b), last layer linear ---
    h = x_ref[...]
    for w_ref, b_ref in layer_refs[:-1]:
        h = jnp.tanh(
            jnp.dot(h, w_ref[...], preferred_element_type=jnp.float32)
            + b_ref[...]
        )
    w_ref, b_ref = layer_refs[-1]
    mu = jnp.dot(h, w_ref[...], preferred_element_type=jnp.float32) + b_ref[...]

    # --- Normal(mu, exp(log_std)): sample + log_prob, all in-VMEM ---
    log_std = log_std_ref[...]            # (1, A)
    std = jnp.exp(log_std)
    inv_std = jnp.exp(-log_std)

    pi = mu + std * noise_ref[...]
    pi_ref[...] = pi.astype(pi_ref.dtype)

    def _log_prob_sum(v):                 # sum over action dim -> (B, 1)
        z = (v - mu) * inv_std
        return jnp.sum(-0.5 * z * z - log_std - _HALF_LOG_2PI,
                       axis=-1, keepdims=True)

    logp_pi_ref[...] = _log_prob_sum(pi)
    if has_action:
        logp_ref[...] = _log_prob_sum(a_ref[...])


def gaussian_policy_forward(x, params, log_std, noise, a=None):
    """Single fused pallas_call for the whole GaussianPolicy forward."""
    batch = x.shape[0]
    action_dim = log_std.shape[-1]
    has_action = a is not None
    num_layers = len(params)

    inputs = [x]
    for w_t, b in params:
        inputs.extend([w_t, b])
    inputs.extend([log_std, noise])
    out_shapes = [
        jax.ShapeDtypeStruct((batch, action_dim), jnp.float32),  # pi
        jax.ShapeDtypeStruct((batch, 1), jnp.float32),           # logp_pi
    ]
    if has_action:
        inputs.append(a)
        out_shapes.append(jax.ShapeDtypeStruct((batch, 1), jnp.float32))  # logp

    vmem = pl.BlockSpec(memory_space=pltpu.VMEM)
    kernel = functools.partial(
        _gaussian_policy_kernel, num_layers=num_layers, has_action=has_action
    )
    outs = pl.pallas_call(
        kernel,
        out_shape=tuple(out_shapes),
        in_specs=[vmem] * len(inputs),
        out_specs=tuple([vmem] * len(out_shapes)),
    )(*inputs)

    if has_action:
        pi, logp_pi, logp = outs
        return pi, logp.reshape(batch), logp_pi.reshape(batch)
    pi, logp_pi = outs
    return pi, None, logp_pi.reshape(batch)


class GaussianPolicy:
    """JAX/Pallas port of the PyTorch GaussianPolicy (mu MLP + diag Normal)."""

    def __init__(self, input_dim, hidden_dims, action_dim, key):
        self.action_dim = action_dim
        dims = [input_dim] + list(hidden_dims) + [action_dim]
        self.params = []
        for din, dout in zip(dims[:-1], dims[1:]):
            key, wkey = jax.random.split(key)
            # nn.Linear default weight init U(-1/sqrt(din), 1/sqrt(din));
            # stored PRE-TRANSPOSED as (din, dout). Bias zeroed (nn.init.zeros_).
            bound = 1.0 / (din ** 0.5)
            w_t = jax.random.uniform(
                wkey, (din, dout), dtype=jnp.float32, minval=-bound, maxval=bound
            )
            b = jnp.zeros((1, dout), dtype=jnp.float32)
            self.params.append((w_t, b))
        # log_std parameter: -0.5 * ones(action_dim), kept 2D for VMEM layout.
        self.log_std = jnp.full((1, action_dim), -0.5, dtype=jnp.float32)

    def __call__(self, x, a=None, *, key):
        # Explicit PRNG key replaces torch's stateful sampler.
        noise = jax.random.normal(
            key, (x.shape[0], self.action_dim), dtype=jnp.float32
        )
        return gaussian_policy_forward(x, self.params, self.log_std, noise, a=a)


if __name__ == "__main__":
    key = jax.random.PRNGKey(0)
    key, init_key, x_key, a_key, noise_key = jax.random.split(key, 5)

    input_dim, hidden_dims, action_dim = 32, (64, 64), 8
    batch = 8

    policy = GaussianPolicy(input_dim, hidden_dims, action_dim, key=init_key)
    x = jax.random.normal(x_key, (batch, input_dim), dtype=jnp.float32)
    a = jax.random.normal(a_key, (batch, action_dim), dtype=jnp.float32)

    # Path with an action provided (pi, logp, logp_pi).
    pi, logp, logp_pi = policy(x, a=a, key=noise_key)
    jax.block_until_ready((pi, logp, logp_pi))

    # Path with a=None (logp is None, matching the torch module).
    pi2, logp2, logp_pi2 = policy(x, a=None, key=noise_key)
    jax.block_until_ready((pi2, logp_pi2))

    # ---- pure-JAX reference of the same forward pass ----
    noise = jax.random.normal(noise_key, (batch, action_dim), dtype=jnp.float32)
    h = x
    for w_t, b in policy.params[:-1]:
        h = jnp.tanh(h @ w_t + b)
    w_t, b = policy.params[-1]
    mu_ref = h @ w_t + b
    std_ref = jnp.exp(policy.log_std)
    pi_ref = mu_ref + std_ref * noise

    def ref_logp_sum(v):
        z = (v - mu_ref) / std_ref
        return jnp.sum(-0.5 * z * z - policy.log_std - _HALF_LOG_2PI, axis=-1)

    assert pi.shape == (batch, action_dim)
    assert logp.shape == (batch,)
    assert logp_pi.shape == (batch,)
    assert logp2 is None
    assert jnp.allclose(pi, pi_ref, atol=1e-4, rtol=1e-4)
    assert jnp.allclose(pi2, pi_ref, atol=1e-4, rtol=1e-4)
    assert jnp.allclose(logp_pi, ref_logp_sum(pi_ref), atol=1e-4, rtol=1e-4)
    assert jnp.allclose(logp_pi2, ref_logp_sum(pi_ref), atol=1e-4, rtol=1e-4)
    assert jnp.allclose(logp, ref_logp_sum(a), atol=1e-4, rtol=1e-4)
    print("KERNEL_OK")
</pallas_src>

<mosaic_0001>
module attributes {stable_mosaic.version = 11 : i64} {
  func.func @_gaussian_policy_kernel(%arg0: memref<8x32xf32, #tpu.memory_space<vmem>>, %arg1: memref<32x64xf32, #tpu.memory_space<vmem>>, %arg2: memref<1x64xf32, #tpu.memory_space<vmem>>, %arg3: memref<64x64xf32, #tpu.memory_space<vmem>>, %arg4: memref<1x64xf32, #tpu.memory_space<vmem>>, %arg5: memref<64x8xf32, #tpu.memory_space<vmem>>, %arg6: memref<1x8xf32, #tpu.memory_space<vmem>>, %arg7: memref<1x8xf32, #tpu.memory_space<vmem>>, %arg8: memref<8x8xf32, #tpu.memory_space<vmem>>, %arg9: memref<8x8xf32, #tpu.memory_space<vmem>>, %arg10: memref<8x8xf32, #tpu.memory_space<vmem>>, %arg11: memref<8x1xf32, #tpu.memory_space<vmem>>, %arg12: memref<8x1xf32, #tpu.memory_space<vmem>>) attributes {dimension_semantics = [], scalar_prefetch = 0 : i64, scratch_operands = 0 : i64, tpu.core_type = #tpu.core_type<tc>} {
    %c0 = arith.constant 0 : index
    %c0_0 = arith.constant 0 : index
    %0 = vector.load %arg0[%c0, %c0_0] : memref<8x32xf32, #tpu.memory_space<vmem>>, vector<8x32xf32>
    %c0_1 = arith.constant 0 : index
    %c0_2 = arith.constant 0 : index
    %1 = vector.load %arg1[%c0_1, %c0_2] : memref<32x64xf32, #tpu.memory_space<vmem>>, vector<32x64xf32>
    %cst = arith.constant dense<0.000000e+00> : vector<8x64xf32>
    %2 = tpu.matmul %0, %1, %cst {dimension_numbers = #tpu.dot_dimension_numbers<[1], [0], [0], [1], [0, 0, 1, 1], [], []>} : vector<8x32xf32>, vector<32x64xf32>, vector<8x64xf32> -> vector<8x64xf32>
    %c0_3 = arith.constant 0 : index
    %c0_4 = arith.constant 0 : index
    %3 = vector.load %arg2[%c0_3, %c0_4] : memref<1x64xf32, #tpu.memory_space<vmem>>, vector<1x64xf32>
    %4 = vector.broadcast %3 : vector<1x64xf32> to vector<8x64xf32>
    %5 = arith.addf %2, %4 : vector<8x64xf32>
    %6 = math.tanh %5 : vector<8x64xf32>
    %c0_5 = arith.constant 0 : index
    %c0_6 = arith.constant 0 : index
    %7 = vector.load %arg3[%c0_5, %c0_6] : memref<64x64xf32, #tpu.memory_space<vmem>>, vector<64x64xf32>
    %cst_7 = arith.constant dense<0.000000e+00> : vector<8x64xf32>
    %8 = tpu.matmul %6, %7, %cst_7 {dimension_numbers = #tpu.dot_dimension_numbers<[1], [0], [0], [1], [0, 0, 1, 1], [], []>} : vector<8x64xf32>, vector<64x64xf32>, vector<8x64xf32> -> vector<8x64xf32>
    %c0_8 = arith.constant 0 : index
    %c0_9 = arith.constant 0 : index
    %9 = vector.load %arg4[%c0_8, %c0_9] : memref<1x64xf32, #tpu.memory_space<vmem>>, vector<1x64xf32>
    %10 = vector.broadcast %9 : vector<1x64xf32> to vector<8x64xf32>
    %11 = arith.addf %8, %10 : vector<8x64xf32>
    %12 = math.tanh %11 : vector<8x64xf32>
    %c0_10 = arith.constant 0 : index
    %c0_11 = arith.constant 0 : index
    %13 = vector.load %arg5[%c0_10, %c0_11] : memref<64x8xf32, #tpu.memory_space<vmem>>, vector<64x8xf32>
    %cst_12 = arith.constant dense<0.000000e+00> : vector<8x8xf32>
    %14 = tpu.matmul %12, %13, %cst_12 {dimension_numbers = #tpu.dot_dimension_numbers<[1], [0], [0], [1], [0, 0, 1, 1], [], []>} : vector<8x64xf32>, vector<64x8xf32>, vector<8x8xf32> -> vector<8x8xf32>
    %c0_13 = arith.constant 0 : index
    %c0_14 = arith.constant 0 : index
    %15 = vector.load %arg6[%c0_13, %c0_14] : memref<1x8xf32, #tpu.memory_space<vmem>>, vector<1x8xf32>
    %16 = vector.broadcast %15 : vector<1x8xf32> to vector<8x8xf32>
    %17 = arith.addf %14, %16 : vector<8x8xf32>
    %c0_15 = arith.constant 0 : index
    %c0_16 = arith.constant 0 : index
    %18 = vector.load %arg7[%c0_15, %c0_16] : memref<1x8xf32, #tpu.memory_space<vmem>>, vector<1x8xf32>
    %19 = math.exp %18 : vector<1x8xf32>
    %cst_17 = arith.constant 0.000000e+00 : f32
    %20 = vector.broadcast %cst_17 : f32 to vector<1x8xf32>
    %21 = arith.subf %20, %18 : vector<1x8xf32>
    %22 = math.exp %21 : vector<1x8xf32>
    %c0_18 = arith.constant 0 : index
    %c0_19 = arith.constant 0 : index
    %23 = vector.load %arg8[%c0_18, %c0_19] : memref<8x8xf32, #tpu.memory_space<vmem>>, vector<8x8xf32>
    %24 = vector.broadcast %19 : vector<1x8xf32> to vector<8x8xf32>
    %25 = arith.mulf %24, %23 : vector<8x8xf32>
    %26 = arith.addf %17, %25 : vector<8x8xf32>
    %c0_20 = arith.constant 0 : index
    %c0_21 = arith.constant 0 : index
    %27 = vector.load %arg10[%c0_20, %c0_21] : memref<8x8xf32, #tpu.memory_space<vmem>>, vector<8x8xf32>
    tpu.vector_store %arg10[%c0_20, %c0_21], %26 {strides = array<i32>} : memref<8x8xf32, #tpu.memory_space<vmem>>, vector<8x8xf32>,
    %28 = arith.subf %26, %17 : vector<8x8xf32>
    %29 = vector.broadcast %22 : vector<1x8xf32> to vector<8x8xf32>
    %30 = arith.mulf %28, %29 : vector<8x8xf32>
    %cst_22 = arith.constant -5.000000e-01 : f32
    %31 = vector.broadcast %cst_22 : f32 to vector<8x8xf32>
    %32 = arith.mulf %31, %30 : vector<8x8xf32>
    %33 = arith.mulf %32, %30 : vector<8x8xf32>
    %34 = vector.broadcast %18 : vector<1x8xf32> to vector<8x8xf32>
    %35 = arith.subf %33, %34 : vector<8x8xf32>
    %cst_23 = arith.constant 0.918938517 : f32
    %36 = vector.broadcast %cst_23 : f32 to vector<8x8xf32>
    %37 = arith.subf %35, %36 : vector<8x8xf32>
    %cst_24 = arith.constant dense<0.000000e+00> : vector<8xf32>
    %38 = vector.multi_reduction <add>, %37, %cst_24 [1] : vector<8x8xf32> to vector<8xf32>
    %39 = vector.shape_cast %38 : vector<8xf32> to vector<8x1xf32>
    %c0_25 = arith.constant 0 : index
    %c0_26 = arith.constant 0 : index
    %40 = vector.load %arg11[%c0_25, %c0_26] : memref<8x1xf32, #tpu.memory_space<vmem>>, vector<8x1xf32>
    tpu.vector_store %arg11[%c0_25, %c0_26], %39 {strides = array<i32>} : memref<8x1xf32, #tpu.memory_space<vmem>>, vector<8x1xf32>,
    %c0_27 = arith.constant 0 : index
    %c0_28 = arith.constant 0 : index
    %41 = vector.load %arg9[%c0_27, %c0_28] : memref<8x8xf32, #tpu.memory_space<vmem>>, vector<8x8xf32>
    %42 = arith.subf %41, %17 : vector<8x8xf32>
    %43 = vector.broadcast %22 : vector<1x8xf32> to vector<8x8xf32>
    %44 = arith.mulf %42, %43 : vector<8x8xf32>
    %cst_29 = arith.constant -5.000000e-01 : f32
    %45 = vector.broadcast %cst_29 : f32 to vector<8x8xf32>
    %46 = arith.mulf %45, %44 : vector<8x8xf32>
    %47 = arith.mulf %46, %44 : vector<8x8xf32>
    %48 = vector.broadcast %18 : vector<1x8xf32> to vector<8x8xf32>
    %49 = arith.subf %47, %48 : vector<8x8xf32>
    %cst_30 = arith.constant 0.918938517 : f32
    %50 = vector.broadcast %cst_30 : f32 to vector<8x8xf32>
    %51 = arith.subf %49, %50 : vector<8x8xf32>
    %cst_31 = arith.constant dense<0.000000e+00> : vector<8xf32>
    %52 = vector.multi_reduction <add>, %51, %cst_31 [1] : vector<8x8xf32> to vector<8xf32>
    %53 = vector.shape_cast %52 : vector<8xf32> to vector<8x1xf32>
    %c0_32 = arith.constant 0 : index
    %c0_33 = arith.constant 0 : index
    %54 = vector.load %arg12[%c0_32, %c0_33] : memref<8x1xf32, #tpu.memory_space<vmem>>, vector<8x1xf32>
    tpu.vector_store %arg12[%c0_32, %c0_33], %53 {strides = array<i32>} : memref<8x1xf32, #tpu.memory_space<vmem>>, vector<8x1xf32>,
    return
  }
}

</mosaic_0001>

<llo_original>
// kernel: tpu_custom_call.1
$region0: #{tpu_custom_call.1}
  #allocation0 [shape = 'u32[]', space=smem, size = 0x4, offset = 0x4, fixed_abs, tag = 'smem constant byte address 0x4 - core index']
  #allocation1 [shape = 'u32[72,128]{1,0:T(1,128)}', space=vmem, size = 0x9000, scoped, tag = 'internal scratch']
  %s0 = inlined_call_operand.vmem [shape: f32[8,32], index: 0, kind: input, shape index: {}]
  %s1 = inlined_call_operand.hbm [shape: f32[32,64], index: 1, kind: input, shape index: {}]
  %s2 = inlined_call_operand.hbm [shape: f32[1,64], index: 2, kind: input, shape index: {}]
  %s3 = inlined_call_operand.vmem [shape: f32[64,64], index: 3, kind: input, shape index: {}]
  %s4 = inlined_call_operand.hbm [shape: f32[1,64], index: 4, kind: input, shape index: {}]
  %s5 = inlined_call_operand.vmem [shape: f32[64,8], index: 5, kind: input, shape index: {}]
  %s6 = inlined_call_operand.hbm [shape: f32[1,8], index: 6, kind: input, shape index: {}]
  %s7 = inlined_call_operand.hbm [shape: f32[1,8], index: 7, kind: input, shape index: {}]
  %s8 = inlined_call_operand.hbm [shape: f32[8,8], index: 8, kind: input, shape index: {}]
  %s9 = inlined_call_operand.vmem [shape: f32[8,8], index: 9, kind: input, shape index: {}]
  %s10 = inlined_call_operand.hbm [shape: f32[8,8], index: 10, kind: output, shape index: {0}]
  %s11 = inlined_call_operand.vmem [shape: f32[8,1], index: 11, kind: output, shape index: {1}]
  %s12 = inlined_call_operand.vmem [shape: f32[8,1], index: 12, kind: output, shape index: {2}]
  %13 = xla_tuple %s10, %s11, %s12
  %s14 = sld [smem:[#allocation0]]
  $region90: #{tpu_custom_call.1} parent=0
    _
  %s16 = ssub.s32 1, %s14
  %s17 = scalar_select 0, %s16, %s14
  $region1: #{tpu_custom_call.1} parent=0
    #allocation2 [shape = 'u8[16384]{0}', space=vmem, size = 0x4000, scoped, tag = 'input window, operand 1, single buffered']
    #allocation3 [shape = 's32[1]{0}', space=sflag, size = 0x4, scoped, tag = 'scoped memory for tpu_custom_call.1']
    #allocation4 [shape = 's32[1]{0}', space=sflag, size = 0x4, scoped, tag = 'scoped memory for tpu_custom_call.1']
    #allocation5 [shape = 'u8[512]{0}', space=vmem, size = 0x400, scoped, tag = 'input window, operand 2, single buffered']
    #allocation6 [shape = 's32[1]{0}', space=sflag, size = 0x4, scoped, tag = 'scoped memory for tpu_custom_call.1']
    #allocation7 [shape = 'u8[512]{0}', space=vmem, size = 0x400, scoped, tag = 'input window, operand 4, single buffered']
    #allocation8 [shape = 'u8[512]{0}', space=vmem, size = 0x400, scoped, tag = 'input window, operand 6, single buffered']
    #allocation9 [shape = 's32[1]{0}', space=sflag, size = 0x4, scoped, tag = 'scoped memory for tpu_custom_call.1']
    #allocation10 [shape = 'u8[512]{0}', space=vmem, size = 0x400, scoped, tag = 'input window, operand 7, single buffered']
    #allocation11 [shape = 'u8[4096]{0}', space=vmem, size = 0x1000, scoped, tag = 'input window, operand 8, single buffered']
    #allocation12 [shape = 's32[1]{0}', space=sflag, size = 0x4, scoped, tag = 'scoped memory for tpu_custom_call.1']
    #allocation13 [shape = 'u8[4096]{0}', space=vmem, size = 0x1000, scoped, tag = 'output window, operand 0, single buffered']
    %18 = vsyncpa [#allocation3], 0
    %19 = vsyncpa [#allocation6], 0
    %20 = vsyncpa [#allocation9], 0
    %21 = vsyncpa [#allocation12], 0
    %22 = vsyncpa [#allocation4], 0
    // Predicated region
    $region2: #{tpu_custom_call.1} parent=1 // pred_check
      _
    $region3: #{tpu_custom_call.1} parent=1 // pred_check_branch
      %24 = sbr.rel (0) target = $region5
    $region4: #{tpu_custom_call.1} parent=1 // pred_region
      _
    $region5: #{tpu_custom_call.1} parent=1 // pred_fallthru
      _
    // Predicated region
    $region6: #{tpu_custom_call.1} parent=1 // pred_check
      _
    $region7: #{tpu_custom_call.1} parent=1 // pred_check_branch
      %26 = sbr.rel (0) target = $region9
    $region8: #{tpu_custom_call.1} parent=1 // pred_region
      %28 = vsyncadd [#allocation3], 0
      %s29 = sshll.u32 %s1, 4
      %s30 = int_to_ptr.hbm [resolvable:$true] %s29
      %s31 = sshll.u32 [#allocation2], 4
      %s32 = int_to_ptr.vmem [resolvable:$true] %s31
      %37 = dma.hbm_to_vmem [thread:$0]  %s30, 512, %s32, [#allocation3], 128, 128, 8
    $region9: #{tpu_custom_call.1} parent=1 // pred_fallthru
      _
    // Predicated region
    $region10: #{tpu_custom_call.1} parent=1 // pred_check
      _
    $region11: #{tpu_custom_call.1} parent=1 // pred_check_branch
      %39 = sbr.rel (0) target = $region13
    $region12: #{tpu_custom_call.1} parent=1 // pred_region
      %41 = vsyncadd [#allocation6], 0
      %s43 = sshll.u32 %s2, 4
      %s44 = int_to_ptr.hbm [resolvable:$true] %s43
      %s45 = sshll.u32 [#allocation5], 4
      %s46 = int_to_ptr.vmem [resolvable:$true] %s45
      %48 = dma.hbm_to_vmem [thread:$0]  %s44, 16, %s46, [#allocation6]
    $region13: #{tpu_custom_call.1} parent=1 // pred_fallthru
      _
    // Predicated region
    $region14: #{tpu_custom_call.1} parent=1 // pred_check
      _
    $region15: #{tpu_custom_call.1} parent=1 // pred_check_branch
      %50 = sbr.rel (0) target = $region17
    $region16: #{tpu_custom_call.1} parent=1 // pred_region
      _
    $region17: #{tpu_custom_call.1} parent=1 // pred_fallthru
      _
    // Predicated region
    $region18: #{tpu_custom_call.1} parent=1 // pred_check
      _
    $region19: #{tpu_custom_call.1} parent=1 // pred_check_branch
      %52 = sbr.rel (0) target = $region21
    $region20: #{tpu_custom_call.1} parent=1 // pred_region
      %54 = vsyncadd [#allocation6], 0
      %s56 = sshll.u32 %s4, 4
      %s57 = int_to_ptr.hbm [resolvable:$true] %s56
      %s58 = sshll.u32 [#allocation7], 4
      %s59 = int_to_ptr.vmem [resolvable:$true] %s58
      %61 = dma.hbm_to_vmem [thread:$0]  %s57, 16, %s59, [#allocation6]
    $region21: #{tpu_custom_call.1} parent=1 // pred_fallthru
      _
    // Predicated region
    $region22: #{tpu_custom_call.1} parent=1 // pred_check
      _
    $region23: #{tpu_custom_call.1} parent=1 // pred_check_branch
      %63 = sbr.rel (0) target = $region25
    $region24: #{tpu_custom_call.1} parent=1 // pred_region
      _
    $region25: #{tpu_custom_call.1} parent=1 // pred_fallthru
      _
    // Predicated region
    $region26: #{tpu_custom_call.1} parent=1 // pred_check
      _
    $region27: #{tpu_custom_call.1} parent=1 // pred_check_branch
      %65 = sbr.rel (0) target = $region29
    $region28: #{tpu_custom_call.1} parent=1 // pred_region
      %67 = vsyncadd [#allocation9], 0
      %s69 = sshll.u32 %s6, 4
      %s70 = int_to_ptr.hbm [resolvable:$true] %s69
      %s71 = sshll.u32 [#allocation8], 4
      %s72 = int_to_ptr.vmem [resolvable:$true] %s71
      %74 = dma.hbm_to_vmem [thread:$0]  %s70, 16, %s72, [#allocation9]
    $region29: #{tpu_custom_call.1} parent=1 // pred_fallthru
      _
    // Predicated region
    $region30: #{tpu_custom_call.1} parent=1 // pred_check
      _
    $region31: #{tpu_custom_call.1} parent=1 // pred_check_branch
      %76 = sbr.rel (0) target = $region33
    $region32: #{tpu_custom_call.1} parent=1 // pred_region
      %78 = vsyncadd [#allocation9], 0
      %s80 = sshll.u32 %s7, 4
      %s81 = int_to_ptr.hbm [resolvable:$true] %s80
      %s82 = sshll.u32 [#allocation10], 4
      %s83 = int_to_ptr.vmem [resolvable:$true] %s82
      %85 = dma.hbm_to_vmem [thread:$0]  %s81, 16, %s83, [#allocation9]
    $region33: #{tpu_custom_call.1} parent=1 // pred_fallthru
      _
    // Predicated region
    $region34: #{tpu_custom_call.1} parent=1 // pred_check
      _
    $region35: #{tpu_custom_call.1} parent=1 // pred_check_branch
      %87 = sbr.rel (0) target = $region37
    $region36: #{tpu_custom_call.1} parent=1 // pred_region
      %89 = vsyncadd [#allocation12], 0
      %s91 = sshll.u32 %s8, 4
      %s92 = int_to_ptr.hbm [resolvable:$true] %s91
      %s93 = sshll.u32 [#allocation11], 4
      %s94 = int_to_ptr.vmem [resolvable:$true] %s93
      %96 = dma.hbm_to_vmem [thread:$0]  %s92, 128, %s94, [#allocation12]
    $region37: #{tpu_custom_call.1} parent=1 // pred_fallthru
      _
    // Predicated region
    $region38: #{tpu_custom_call.1} parent=1 // pred_check
      _
    $region39: #{tpu_custom_call.1} parent=1 // pred_check_branch
      %98 = sbr.rel (0) target = $region41
    $region40: #{tpu_custom_call.1} parent=1 // pred_region
      _
    $region41: #{tpu_custom_call.1} parent=1 // pred_fallthru
      _
    // Predicated region
    $region42: #{tpu_custom_call.1} parent=1 // pred_check
      _
    $region43: #{tpu_custom_call.1} parent=1 // pred_check_branch
      %100 = sbr.rel (0) target = $region45
    $region44: #{tpu_custom_call.1} parent=1 // pred_region
      %102 = dma.done [#allocation3], 512
    $region45: #{tpu_custom_call.1} parent=1 // pred_fallthru
      _
    // Predicated region
    $region46: #{tpu_custom_call.1} parent=1 // pred_check
      _
    $region47: #{tpu_custom_call.1} parent=1 // pred_check_branch
      %104 = sbr.rel (0) target = $region49
    $region48: #{tpu_custom_call.1} parent=1 // pred_region
      %106 = dma.done [#allocation6], 16
    $region49: #{tpu_custom_call.1} parent=1 // pred_fallthru
      _
    // Predicated region
    $region50: #{tpu_custom_call.1} parent=1 // pred_check
      _
    $region51: #{tpu_custom_call.1} parent=1 // pred_check_branch
      %108 = sbr.rel (0) target = $region53
    $region52: #{tpu_custom_call.1} parent=1 // pred_region
      %110 = dma.done [#allocation6], 16
    $region53: #{tpu_custom_call.1} parent=1 // pred_fallthru
      _
    // Predicated region
    $region54: #{tpu_custom_call.1} parent=1 // pred_check
      _
    $region55: #{tpu_custom_call.1} parent=1 // pred_check_branch
      %112 = sbr.rel (0) target = $region57
    $region56: #{tpu_custom_call.1} parent=1 // pred_region
      %114 = dma.done [#allocation9], 16
    $region57: #{tpu_custom_call.1} parent=1 // pred_fallthru
      _
    // Predicated region
    $region58: #{tpu_custom_call.1} parent=1 // pred_check
      _
    $region59: #{tpu_custom_call.1} parent=1 // pred_check_branch
      %116 = sbr.rel (0) target = $region61
    $region60: #{tpu_custom_call.1} parent=1 // pred_region
      %118 = dma.done [#allocation9], 16
    $region61: #{tpu_custom_call.1} parent=1 // pred_fallthru
      _
    // Predicated region
    $region62: #{tpu_custom_call.1} parent=1 // pred_check
      _
    $region63: #{tpu_custom_call.1} parent=1 // pred_check_branch
      %120 = sbr.rel (0) target = $region65
    $region64: #{tpu_custom_call.1} parent=1 // pred_region
      %122 = dma.done [#allocation12], 128
    $region65: #{tpu_custom_call.1} parent=1 // pred_fallthru
      _
    %v123 = vld [vmem:[%s0] sm:$0xff]
    %v124 = vld [vmem:[#allocation2] sm:$0xff]
    %v125 = vld [vmem:[#allocation2 + $0x8] sm:$0xff]
    %v126 = vld [vmem:[#allocation2 + $0x10] sm:$0xff]
    %v127 = vld [vmem:[#allocation2 + $0x18] sm:$0xff]
    %v128 = vld [vmem:[#allocation5] sm:$0x1]
    %v130 = vperm.slane %v128, 0
    %vm132 = vcmask 261120
    %v134 = vsel %vm132, %v123, 0
    %136 = vmatpush.msra.mxu0 0.0
    %137 = vmatpush.msra.mxu0 0.0
    %138 = vmatpush.msra.mxu0 0.0
    %139 = vmatpush.msra.mxu0 0.0
    %140 = vmatpush.msra.mxu0 0.0
    %141 = vmatpush.msra.mxu0 0.0
    %142 = vmatpush.msra.mxu0 0.0
    %143 = vmatpush.msra.mxu0 0.0
    %144 = vmatpush.msra.mxu0 0.0
    %145 = vmatpush.msra.mxu0 0.0
    %146 = vmatpush.msra.mxu0 0.0
    %147 = vmatpush.msra.mxu0 0.0
    %148 = vmatpush.msra.mxu0 %v127
    %149 = vmatpush.msra.mxu0 %v126
    %150 = vmatpush.msra.mxu0 %v125
    %151 = vmatpush.msra.mxu0 %v124
    %152 = vmatmul.f32.gmra.mxu0 %v134
    %v153 = vpop.f32.mrf.mxu0
    %v154 = vadd.f32 %v130, %v153
    %155 = vdwg.mxu0
    %v156 = vtanh.pop %v154
    %v157 = vld [vmem:[%s3] sm:$0xff]
    %v158 = vld [vmem:[%s3 + $0x8] sm:$0xff]
    %v159 = vld [vmem:[%s3 + $0x10] sm:$0xff]
    %v160 = vld [vmem:[%s3 + $0x18] sm:$0xff]
    %v161 = vld [vmem:[%s3 + $0x20] sm:$0xff]
    %v162 = vld [vmem:[%s3 + $0x28] sm:$0xff]
    %v163 = vld [vmem:[%s3 + $0x30] sm:$0xff]
    %v164 = vld [vmem:[%s3 + $0x38] sm:$0xff]
    %v165 = vld [vmem:[#allocation7] sm:$0x1]
    %v167 = vperm.slane %v165, 0
    %vm169 = vcmask 523264
    %v171 = vsel %vm169, %v156, 0
    %173 = vmatpush.msra.mxu0 0.0
    %174 = vmatpush.msra.mxu0 0.0
    %175 = vmatpush.msra.mxu0 0.0
    %176 = vmatpush.msra.mxu0 0.0
    %177 = vmatpush.msra.mxu0 0.0
    %178 = vmatpush.msra.mxu0 0.0
    %179 = vmatpush.msra.mxu0 0.0
    %180 = vmatpush.msra.mxu0 0.0
    %181 = vmatpush.msra.mxu0 %v164
    %182 = vmatpush.msra.mxu0 %v163
    %183 = vmatpush.msra.mxu0 %v162
    %184 = vmatpush.msra.mxu0 %v161
    %185 = vmatpush.msra.mxu0 %v160
    %186 = vmatpush.msra.mxu0 %v159
    %187 = vmatpush.msra.mxu0 %v158
    %188 = vmatpush.msra.mxu0 %v157
    %189 = vmatmul.f32.gmra.mxu0 %v171
    %v190 = vpop.f32.mrf.mxu0
    %v191 = vadd.f32 %v167, %v190
    %192 = vdwg.mxu0
    %v193 = vtanh.pop %v191
    %v194 = vld [vmem:[%s5] sm:$0xff]
    %v195 = vld [vmem:[%s5 + $0x8] sm:$0xff]
    %v196 = vld [vmem:[%s5 + $0x10] sm:$0xff]
    %v197 = vld [vmem:[%s5 + $0x18] sm:$0xff]
    %v198 = vld [vmem:[%s5 + $0x20] sm:$0xff]
    %v199 = vld [vmem:[%s5 + $0x28] sm:$0xff]
    %v200 = vld [vmem:[%s5 + $0x30] sm:$0xff]
    %v201 = vld [vmem:[%s5 + $0x38] sm:$0xff]
    %v202 = vld [vmem:[#allocation8] sm:$0x1]
    %v204 = vperm.slane %v202, 0
    %v207 = vsel %vm169, %v193, 0
    %209 = vmatpush.msra.mxu0 0.0
    %210 = vmatpush.msra.mxu0 0.0
    %211 = vmatpush.msra.mxu0 0.0
    %212 = vmatpush.msra.mxu0 0.0
    %213 = vmatpush.msra.mxu0 0.0
    %214 = vmatpush.msra.mxu0 0.0
    %215 = vmatpush.msra.mxu0 0.0
    %216 = vmatpush.msra.mxu0 0.0
    %217 = vmatpush.msra.mxu0 %v201
    %218 = vmatpush.msra.mxu0 %v200
    %219 = vmatpush.msra.mxu0 %v199
    %220 = vmatpush.msra.mxu0 %v198
    %221 = vmatpush.msra.mxu0 %v197
    %222 = vmatpush.msra.mxu0 %v196
    %223 = vmatpush.msra.mxu0 %v195
    %224 = vmatpush.msra.mxu0 %v194
    %225 = vmatmul.f32.gmra.mxu0 %v207
    %v226 = vpop.f32.mrf.mxu0
    %v227 = vadd.f32 %v204, %v226
    %228 = vdwg.mxu0
    %v229 = vld [vmem:[#allocation10] sm:$0x1]
    %v230 = vmul.f32 %v229, 1.442695
    %v231 = vpow.pop %v230
    %v232 = vsub.f32 0.0, %v229
    %v233 = vmul.f32 %v232, 1.442695
    %v234 = vpow.pop %v233
    %v235 = vld [vmem:[#allocation11] sm:$0xff]
    %v237 = vperm.slane %v231, 0
    %v239 = vmul.f32 %v237, %v235
    %v240 = vadd.f32 %v227, %v239
    %vm241 = vcmask 64512
    %242 = vst.msk [vmem:[#allocation13] sm:$0xff] %vm241, %v240
    %v243 = vsub.f32 %v240, %v227
    %v245 = vperm.slane %v234, 0
    %v247 = vmul.f32 %v243, %v245
    %v248 = vmul.f32 %v247, -0.5
    %v249 = vmul.f32 %v248, %v247
    %v251 = vperm.slane %v229, 0
    %v253 = vsub.f32 %v249, %v251
    %v254 = vsub.f32 %v253, 0.9189385
    %v255 = vsel %vm241, %v254, 0.0
    %256 = vadd.xlane.f32.xlu0 %v255
    %v257 = vpop.xlane.xlu0 %256
    %vm258 = vcmask 7168
    %259 = vst.msk [vmem:[%s11] sm:$0xff] %vm258, %v257
    %v260 = vld [vmem:[%s9] sm:$0xff]
    %v261 = vsub.f32 %v260, %v227
    %v262 = vmul.f32 %v261, %v245
    %v263 = vmul.f32 %v262, -0.5
    %v264 = vmul.f32 %v263, %v262
    %v265 = vsub.f32 %v264, %v251
    %v266 = vsub.f32 %v265, 0.9189385
    %v267 = vsel %vm241, %v266, 0.0
    %268 = vadd.xlane.f32.xlu0 %v267
    %v269 = vpop.xlane.xlu0 %268
    %270 = vst.msk [vmem:[%s12] sm:$0xff] %vm258, %v269
    // Predicated region
    $region66: #{tpu_custom_call.1} parent=1 // pred_check
      _
    $region67: #{tpu_custom_call.1} parent=1 // pred_check_branch
      %272 = sbr.rel (0) target = $region69
    $region68: #{tpu_custom_call.1} parent=1 // pred_region
      %274 = vsyncadd [#allocation4], 0
      %s276 = sshll.u32 [#allocation13], 4
      %s277 = int_to_ptr.vmem [resolvable:$true] %s276
      %s278 = sshll.u32 %s10, 4
      %s279 = int_to_ptr.hbm [resolvable:$true] %s278
      %281 = dma.vmem_to_hbm [thread:$0]  %s277, 128, %s279, [#allocation4]
    $region69: #{tpu_custom_call.1} parent=1 // pred_fallthru
      _
    // Predicated region
    $region70: #{tpu_custom_call.1} parent=1 // pred_check
      _
    $region71: #{tpu_custom_call.1} parent=1 // pred_check_branch
      %283 = sbr.rel (0) target = $region73
    $region72: #{tpu_custom_call.1} parent=1 // pred_region
      _
    $region73: #{tpu_custom_call.1} parent=1 // pred_fallthru
      _
    // Predicated region
    $region74: #{tpu_custom_call.1} parent=1 // pred_check
      _
    $region75: #{tpu_custom_call.1} parent=1 // pred_check_branch
      %285 = sbr.rel (0) target = $region77
    $region76: #{tpu_custom_call.1} parent=1 // pred_region
      _
    $region77: #{tpu_custom_call.1} parent=1 // pred_fallthru
      _
    // Predicated region
    $region78: #{tpu_custom_call.1} parent=1 // pred_check
      _
    $region79: #{tpu_custom_call.1} parent=1 // pred_check_branch
      %287 = sbr.rel (0) target = $region81
    $region80: #{tpu_custom_call.1} parent=1 // pred_region
      %289 = dma.done [#allocation4], 128
    $region81: #{tpu_custom_call.1} parent=1 // pred_fallthru
      _
    // Predicated region
    $region82: #{tpu_custom_call.1} parent=1 // pred_check
      _
    $region83: #{tpu_custom_call.1} parent=1 // pred_check_branch
      %291 = sbr.rel (0) target = $region85
    $region84: #{tpu_custom_call.1} parent=1 // pred_region
      _
    $region85: #{tpu_custom_call.1} parent=1 // pred_fallthru
      _
    // Predicated region
    $region86: #{tpu_custom_call.1} parent=1 // pred_check
      _
    $region87: #{tpu_custom_call.1} parent=1 // pred_check_branch
      %293 = sbr.rel (0) target = $region89
    $region88: #{tpu_custom_call.1} parent=1 // pred_region
      _
    $region89: #{tpu_custom_call.1} parent=1 // pred_fallthru
      _
    %294 = vsyncpa [#allocation3], 1
    %295 = vsyncpa [#allocation6], 1
    %296 = vsyncpa [#allocation9], 1
    %297 = vsyncpa [#allocation12], 1
    %298 = vsyncpa [#allocation4], 1

</llo_original>
